<compile_context>
chip_gen: v6e
topology: v6e:2x2x1
jax: 0.10.0
libtpu: 0.0.40
codegen_flags: <defaults>
</compile_context>

<pallas_src>
import jax
import jax.numpy as jnp
from jax.experimental import pallas as pl
from jax.experimental.pallas import tpu as pltpu


def _cdiv(a, b):
    return -(-a // b)


def _outconv_kernel(w_ref, b_ref, x_ref, o_ref):
    # w_ref: (C_out, C_in)      f32 in SMEM (scalar reads)
    # b_ref: (C_out,)           f32 in SMEM (scalar reads)
    # x_ref: (C_in,  R_blk, L)  in VMEM  -- dense (sublane, lane) spatial tile
    # o_ref: (C_out, R_blk, L)  in VMEM  -- dense (sublane, lane) spatial tile
    c_in = x_ref.shape[0]
    c_out = o_ref.shape[0]
    # Tiny contraction fully unrolled on the VPU: scalar (SMEM) * dense tile,
    # bias folded into the first term.  Each x_ref[c] / o_ref[o] is a full
    # (R_blk, L) block -> full-vreg loads and unmasked vst stores.
    for o in range(c_out):
        acc = x_ref[0].astype(jnp.float32) * w_ref[o, 0] + b_ref[o]
        for c in range(1, c_in):
            acc = acc + x_ref[c].astype(jnp.float32) * w_ref[o, c]
        o_ref[o] = acc.astype(o_ref.dtype)


def outconv_1x1(x_nchw, weight, bias, *, target_block_bytes=2 << 20):
    """1x1 Conv2d (nn.Conv2d(in_ch, out_ch, kernel_size=1)) forward.

    x_nchw: (N, C_in, H, W)
    weight: (C_out, C_in, 1, 1)  (PyTorch conv weight layout)
    bias:   (C_out,)
    returns (N, C_out, H, W)
    """
    N, C_in, H, W = x_nchw.shape
    C_out = weight.shape[0]
    HW = H * W
    LANES = 128

    w_mat = weight.reshape(C_out, C_in).astype(jnp.float32)  # 12 floats -> SMEM
    b_vec = bias.astype(jnp.float32)                         # (C_out,)  -> SMEM

    # Dense (sublane, lane) view of the spatial axis; both options are free views.
    if HW % LANES == 0:
        R, L = HW // LANES, LANES
        x4 = x_nchw.reshape(N, C_in, R, L)
    else:
        R, L = H, W          # no pad pass; lane density = W/ceil128(W)
        x4 = x_nchw

    # Spatial tile: ~target_block_bytes of input per block, multiple of 8
    # sublanes (or the full extent).  Ragged last block handled by cdiv grid.
    bytes_per_row = C_in * L * x4.dtype.itemsize
    r_blk = max(8, (target_block_bytes // bytes_per_row) // 8 * 8)
    r_blk = min(r_blk, R)
    if r_blk < R:
        r_blk = max(8, (r_blk // 8) * 8)
    # Keep >= 4 grid steps when feasible so both v7x TensorCores get work.
    while N * _cdiv(R, r_blk) < 4:
        nxt = (r_blk // 2 // 8) * 8
        if nxt < 8:
            break
        r_blk = nxt

    grid = (N, _cdiv(R, r_blk))

    y4 = pl.pallas_call(
        _outconv_kernel,
        out_shape=jax.ShapeDtypeStruct((N, C_out, R, L), x_nchw.dtype),
        grid=grid,
        in_specs=[
            pl.BlockSpec(memory_space=pltpu.MemorySpace.SMEM),   # weight (whole)
            pl.BlockSpec(memory_space=pltpu.MemorySpace.SMEM),   # bias   (whole)
            pl.BlockSpec((None, C_in, r_blk, L), lambda n, j: (n, 0, j, 0)),
        ],
        out_specs=pl.BlockSpec((None, C_out, r_blk, L), lambda n, j: (n, 0, j, 0)),
        compiler_params=pltpu.CompilerParams(
            dimension_semantics=("parallel", "parallel"),
        ),
    )(w_mat, b_vec, x4)

    return y4.reshape(N, C_out, H, W)


def _init_params(key, in_channels, out_channels):
    # Deterministic init mimicking PyTorch Conv2d default (kaiming-uniform-ish bounds).
    kw, kb = jax.random.split(key)
    fan_in = in_channels * 1 * 1
    bound = 1.0 / jnp.sqrt(fan_in)
    weight = jax.random.uniform(
        kw, (out_channels, in_channels, 1, 1), jnp.float32, -bound, bound
    )
    bias = jax.random.uniform(kb, (out_channels,), jnp.float32, -bound, bound)
    return weight, bias


if __name__ == "__main__":
    key = jax.random.PRNGKey(0)
    kx, kp, kx2 = jax.random.split(key, 3)

    N, C_in, H, W = 2, 4, 16, 16
    C_out = 3

    x = jax.random.normal(kx, (N, C_in, H, W), jnp.float32)
    weight, bias = _init_params(kp, C_in, C_out)

    # 128-aligned spatial path (HW % 128 == 0 -> dense (HW//128, 128) tiles)
    y = jax.block_until_ready(outconv_1x1(x, weight, bias))
    ref = (
        jnp.einsum("nchw,oc->nohw", x, weight.reshape(C_out, C_in))
        + bias[None, :, None, None]
    )
    assert y.shape == (N, C_out, H, W)
    assert jnp.allclose(y, ref, atol=1e-5, rtol=1e-5)

    # Non-aligned spatial path (HW % 128 != 0 -> (H, W) sublane/lane tiling)
    H2, W2 = 9, 20
    x2 = jax.random.normal(kx2, (N, C_in, H2, W2), jnp.float32)
    y2 = jax.block_until_ready(outconv_1x1(x2, weight, bias))
    ref2 = (
        jnp.einsum("nchw,oc->nohw", x2, weight.reshape(C_out, C_in))
        + bias[None, :, None, None]
    )
    assert y2.shape == (N, C_out, H2, W2)
    assert jnp.allclose(y2, ref2, atol=1e-5, rtol=1e-5)

    print("KERNEL_OK")
</pallas_src>

<mosaic_0001>
module attributes {stable_mosaic.version = 11 : i64} {
  func.func @_outconv_kernel(%arg0: i32, %arg1: i32, %arg2: memref<3x4xf32, #tpu.memory_space<smem>>, %arg3: memref<3xf32, #tpu.memory_space<smem>>, %arg4: memref<1x4x2x128xf32, #tpu.memory_space<vmem>>, %arg5: memref<1x3x2x128xf32, #tpu.memory_space<vmem>>) attributes {dimension_semantics = [#tpu.dimension_semantics<parallel>, #tpu.dimension_semantics<parallel>], iteration_bounds = array<i64: 2, 1>, scalar_prefetch = 0 : i64, scratch_operands = 0 : i64, tpu.core_type = #tpu.core_type<tc>, window_params = [{transform_indices = @transform_0, window_bounds = array<i64: 3, 4>}, {transform_indices = @transform_1, window_bounds = array<i64: 3>}, {transform_indices = @transform_2, window_bounds = array<i64: 1, 4, 2, 128>}, {transform_indices = @transform_3, window_bounds = array<i64: 1, 3, 2, 128>}]} {
    %c0 = arith.constant 0 : index
    %c0_0 = arith.constant 0 : index
    %c0_1 = arith.constant 0 : index
    %c0_2 = arith.constant 0 : index
    %0 = vector.load %arg4[%c0, %c0_0, %c0_1, %c0_2] : memref<1x4x2x128xf32, #tpu.memory_space<vmem>>, vector<1x1x2x128xf32>
    %1 = vector.shape_cast %0 : vector<1x1x2x128xf32> to vector<2x128xf32>
    %c0_3 = arith.constant 0 : index
    %c0_4 = arith.constant 0 : index
    %2 = memref.load %arg2[%c0_3, %c0_4] : memref<3x4xf32, #tpu.memory_space<smem>>
    %3 = vector.broadcast %2 : f32 to vector<2x128xf32>
    %4 = arith.mulf %1, %3 : vector<2x128xf32>
    %c0_5 = arith.constant 0 : index
    %5 = memref.load %arg3[%c0_5] : memref<3xf32, #tpu.memory_space<smem>>
    %6 = vector.broadcast %5 : f32 to vector<2x128xf32>
    %7 = arith.addf %4, %6 : vector<2x128xf32>
    %c0_6 = arith.constant 0 : index
    %c1 = arith.constant 1 : index
    %c0_7 = arith.constant 0 : index
    %c0_8 = arith.constant 0 : index
    %8 = vector.load %arg4[%c0_6, %c1, %c0_7, %c0_8] : memref<1x4x2x128xf32, #tpu.memory_space<vmem>>, vector<1x1x2x128xf32>
    %9 = vector.shape_cast %8 : vector<1x1x2x128xf32> to vector<2x128xf32>
    %c0_9 = arith.constant 0 : index
    %c1_10 = arith.constant 1 : index
    %10 = memref.load %arg2[%c0_9, %c1_10] : memref<3x4xf32, #tpu.memory_space<smem>>
    %11 = vector.broadcast %10 : f32 to vector<2x128xf32>
    %12 = arith.mulf %9, %11 : vector<2x128xf32>
    %13 = arith.addf %7, %12 : vector<2x128xf32>
    %c0_11 = arith.constant 0 : index
    %c2 = arith.constant 2 : index
    %c0_12 = arith.constant 0 : index
    %c0_13 = arith.constant 0 : index
    %14 = vector.load %arg4[%c0_11, %c2, %c0_12, %c0_13] : memref<1x4x2x128xf32, #tpu.memory_space<vmem>>, vector<1x1x2x128xf32>
    %15 = vector.shape_cast %14 : vector<1x1x2x128xf32> to vector<2x128xf32>
    %c0_14 = arith.constant 0 : index
    %c2_15 = arith.constant 2 : index
    %16 = memref.load %arg2[%c0_14, %c2_15] : memref<3x4xf32, #tpu.memory_space<smem>>
    %17 = vector.broadcast %16 : f32 to vector<2x128xf32>
    %18 = arith.mulf %15, %17 : vector<2x128xf32>
    %19 = arith.addf %13, %18 : vector<2x128xf32>
    %c0_16 = arith.constant 0 : index
    %c3 = arith.constant 3 : index
    %c0_17 = arith.constant 0 : index
    %c0_18 = arith.constant 0 : index
    %20 = vector.load %arg4[%c0_16, %c3, %c0_17, %c0_18] : memref<1x4x2x128xf32, #tpu.memory_space<vmem>>, vector<1x1x2x128xf32>
    %21 = vector.shape_cast %20 : vector<1x1x2x128xf32> to vector<2x128xf32>
    %c0_19 = arith.constant 0 : index
    %c3_20 = arith.constant 3 : index
    %22 = memref.load %arg2[%c0_19, %c3_20] : memref<3x4xf32, #tpu.memory_space<smem>>
    %23 = vector.broadcast %22 : f32 to vector<2x128xf32>
    %24 = arith.mulf %21, %23 : vector<2x128xf32>
    %25 = arith.addf %19, %24 : vector<2x128xf32>
    %c0_21 = arith.constant 0 : index
    %c0_22 = arith.constant 0 : index
    %c0_23 = arith.constant 0 : index
    %c0_24 = arith.constant 0 : index
    %26 = vector.load %arg5[%c0_21, %c0_22, %c0_23, %c0_24] : memref<1x3x2x128xf32, #tpu.memory_space<vmem>>, vector<1x1x2x128xf32>
    %27 = vector.shape_cast %26 : vector<1x1x2x128xf32> to vector<2x128xf32>
    %28 = vector.shape_cast %25 : vector<2x128xf32> to vector<1x1x2x128xf32>
    tpu.vector_store %arg5[%c0_21, %c0_22, %c0_23, %c0_24], %28 {strides = array<i32>} : memref<1x3x2x128xf32, #tpu.memory_space<vmem>>, vector<1x1x2x128xf32>,
    %c0_25 = arith.constant 0 : index
    %c0_26 = arith.constant 0 : index
    %c0_27 = arith.constant 0 : index
    %c0_28 = arith.constant 0 : index
    %29 = vector.load %arg4[%c0_25, %c0_26, %c0_27, %c0_28] : memref<1x4x2x128xf32, #tpu.memory_space<vmem>>, vector<1x1x2x128xf32>
    %30 = vector.shape_cast %29 : vector<1x1x2x128xf32> to vector<2x128xf32>
    %c1_29 = arith.constant 1 : index
    %c0_30 = arith.constant 0 : index
    %31 = memref.load %arg2[%c1_29, %c0_30] : memref<3x4xf32, #tpu.memory_space<smem>>
    %32 = vector.broadcast %31 : f32 to vector<2x128xf32>
    %33 = arith.mulf %30, %32 : vector<2x128xf32>
    %c1_31 = arith.constant 1 : index
    %34 = memref.load %arg3[%c1_31] : memref<3xf32, #tpu.memory_space<smem>>
    %35 = vector.broadcast %34 : f32 to vector<2x128xf32>
    %36 = arith.addf %33, %35 : vector<2x128xf32>
    %c0_32 = arith.constant 0 : index
    %c1_33 = arith.constant 1 : index
    %c0_34 = arith.constant 0 : index
    %c0_35 = arith.constant 0 : index
    %37 = vector.load %arg4[%c0_32, %c1_33, %c0_34, %c0_35] : memref<1x4x2x128xf32, #tpu.memory_space<vmem>>, vector<1x1x2x128xf32>
    %38 = vector.shape_cast %37 : vector<1x1x2x128xf32> to vector<2x128xf32>
    %c1_36 = arith.constant 1 : index
    %c1_37 = arith.constant 1 : index
    %39 = memref.load %arg2[%c1_36, %c1_37] : memref<3x4xf32, #tpu.memory_space<smem>>
    %40 = vector.broadcast %39 : f32 to vector<2x128xf32>
    %41 = arith.mulf %38, %40 : vector<2x128xf32>
    %42 = arith.addf %36, %41 : vector<2x128xf32>
    %c0_38 = arith.constant 0 : index
    %c2_39 = arith.constant 2 : index
    %c0_40 = arith.constant 0 : index
    %c0_41 = arith.constant 0 : index
    %43 = vector.load %arg4[%c0_38, %c2_39, %c0_40, %c0_41] : memref<1x4x2x128xf32, #tpu.memory_space<vmem>>, vector<1x1x2x128xf32>
    %44 = vector.shape_cast %43 : vector<1x1x2x128xf32> to vector<2x128xf32>
    %c1_42 = arith.constant 1 : index
    %c2_43 = arith.constant 2 : index
    %45 = memref.load %arg2[%c1_42, %c2_43] : memref<3x4xf32, #tpu.memory_space<smem>>
    %46 = vector.broadcast %45 : f32 to vector<2x128xf32>
    %47 = arith.mulf %44, %46 : vector<2x128xf32>
    %48 = arith.addf %42, %47 : vector<2x128xf32>
    %c0_44 = arith.constant 0 : index
    %c3_45 = arith.constant 3 : index
    %c0_46 = arith.constant 0 : index
    %c0_47 = arith.constant 0 : index
    %49 = vector.load %arg4[%c0_44, %c3_45, %c0_46, %c0_47] : memref<1x4x2x128xf32, #tpu.memory_space<vmem>>, vector<1x1x2x128xf32>
    %50 = vector.shape_cast %49 : vector<1x1x2x128xf32> to vector<2x128xf32>
    %c1_48 = arith.constant 1 : index
    %c3_49 = arith.constant 3 : index
    %51 = memref.load %arg2[%c1_48, %c3_49] : memref<3x4xf32, #tpu.memory_space<smem>>
    %52 = vector.broadcast %51 : f32 to vector<2x128xf32>
    %53 = arith.mulf %50, %52 : vector<2x128xf32>
    %54 = arith.addf %48, %53 : vector<2x128xf32>
    %c0_50 = arith.constant 0 : index
    %c1_51 = arith.constant 1 : index
    %c0_52 = arith.constant 0 : index
    %c0_53 = arith.constant 0 : index
    %55 = vector.load %arg5[%c0_50, %c1_51, %c0_52, %c0_53] : memref<1x3x2x128xf32, #tpu.memory_space<vmem>>, vector<1x1x2x128xf32>
    %56 = vector.shape_cast %55 : vector<1x1x2x128xf32> to vector<2x128xf32>
    %57 = vector.shape_cast %54 : vector<2x128xf32> to vector<1x1x2x128xf32>
    tpu.vector_store %arg5[%c0_50, %c1_51, %c0_52, %c0_53], %57 {strides = array<i32>} : memref<1x3x2x128xf32, #tpu.memory_space<vmem>>, vector<1x1x2x128xf32>,
    %c0_54 = arith.constant 0 : index
    %c0_55 = arith.constant 0 : index
    %c0_56 = arith.constant 0 : index
    %c0_57 = arith.constant 0 : index
    %58 = vector.load %arg4[%c0_54, %c0_55, %c0_56, %c0_57] : memref<1x4x2x128xf32, #tpu.memory_space<vmem>>, vector<1x1x2x128xf32>
    %59 = vector.shape_cast %58 : vector<1x1x2x128xf32> to vector<2x128xf32>
    %c2_58 = arith.constant 2 : index
    %c0_59 = arith.constant 0 : index
    %60 = memref.load %arg2[%c2_58, %c0_59] : memref<3x4xf32, #tpu.memory_space<smem>>
    %61 = vector.broadcast %60 : f32 to vector<2x128xf32>
    %62 = arith.mulf %59, %61 : vector<2x128xf32>
    %c2_60 = arith.constant 2 : index
    %63 = memref.load %arg3[%c2_60] : memref<3xf32, #tpu.memory_space<smem>>
    %64 = vector.broadcast %63 : f32 to vector<2x128xf32>
    %65 = arith.addf %62, %64 : vector<2x128xf32>
    %c0_61 = arith.constant 0 : index
    %c1_62 = arith.constant 1 : index
    %c0_63 = arith.constant 0 : index
    %c0_64 = arith.constant 0 : index
    %66 = vector.load %arg4[%c0_61, %c1_62, %c0_63, %c0_64] : memref<1x4x2x128xf32, #tpu.memory_space<vmem>>, vector<1x1x2x128xf32>
    %67 = vector.shape_cast %66 : vector<1x1x2x128xf32> to vector<2x128xf32>
    %c2_65 = arith.constant 2 : index
    %c1_66 = arith.constant 1 : index
    %68 = memref.load %arg2[%c2_65, %c1_66] : memref<3x4xf32, #tpu.memory_space<smem>>
    %69 = vector.broadcast %68 : f32 to vector<2x128xf32>
    %70 = arith.mulf %67, %69 : vector<2x128xf32>
    %71 = arith.addf %65, %70 : vector<2x128xf32>
    %c0_67 = arith.constant 0 : index
    %c2_68 = arith.constant 2 : index
    %c0_69 = arith.constant 0 : index
    %c0_70 = arith.constant 0 : index
    %72 = vector.load %arg4[%c0_67, %c2_68, %c0_69, %c0_70] : memref<1x4x2x128xf32, #tpu.memory_space<vmem>>, vector<1x1x2x128xf32>
    %73 = vector.shape_cast %72 : vector<1x1x2x128xf32> to vector<2x128xf32>
    %c2_71 = arith.constant 2 : index
    %c2_72 = arith.constant 2 : index
    %74 = memref.load %arg2[%c2_71, %c2_72] : memref<3x4xf32, #tpu.memory_space<smem>>
    %75 = vector.broadcast %74 : f32 to vector<2x128xf32>
    %76 = arith.mulf %73, %75 : vector<2x128xf32>
    %77 = arith.addf %71, %76 : vector<2x128xf32>
    %c0_73 = arith.constant 0 : index
    %c3_74 = arith.constant 3 : index
    %c0_75 = arith.constant 0 : index
    %c0_76 = arith.constant 0 : index
    %78 = vector.load %arg4[%c0_73, %c3_74, %c0_75, %c0_76] : memref<1x4x2x128xf32, #tpu.memory_space<vmem>>, vector<1x1x2x128xf32>
    %79 = vector.shape_cast %78 : vector<1x1x2x128xf32> to vector<2x128xf32>
    %c2_77 = arith.constant 2 : index
    %c3_78 = arith.constant 3 : index
    %80 = memref.load %arg2[%c2_77, %c3_78] : memref<3x4xf32, #tpu.memory_space<smem>>
    %81 = vector.broadcast %80 : f32 to vector<2x128xf32>
    %82 = arith.mulf %79, %81 : vector<2x128xf32>
    %83 = arith.addf %77, %82 : vector<2x128xf32>
    %c0_79 = arith.constant 0 : index
    %c2_80 = arith.constant 2 : index
    %c0_81 = arith.constant 0 : index
    %c0_82 = arith.constant 0 : index
    %84 = vector.load %arg5[%c0_79, %c2_80, %c0_81, %c0_82] : memref<1x3x2x128xf32, #tpu.memory_space<vmem>>, vector<1x1x2x128xf32>
    %85 = vector.shape_cast %84 : vector<1x1x2x128xf32> to vector<2x128xf32>
    %86 = vector.shape_cast %83 : vector<2x128xf32> to vector<1x1x2x128xf32>
    tpu.vector_store %arg5[%c0_79, %c2_80, %c0_81, %c0_82], %86 {strides = array<i32>} : memref<1x3x2x128xf32, #tpu.memory_space<vmem>>, vector<1x1x2x128xf32>,
    return
  }
  func.func @transform_0(%arg0: i32, %arg1: i32) -> (i32, i32) {
    %c0_i32 = arith.constant 0 : i32
    %c0_i32_0 = arith.constant 0 : i32
    %c0_i32_1 = arith.constant 0 : i32
    return %c0_i32, %c0_i32_0 : i32, i32
  }
  func.func @transform_1(%arg0: i32, %arg1: i32) -> i32 {
    %c0_i32 = arith.constant 0 : i32
    %c0_i32_0 = arith.constant 0 : i32
    return %c0_i32 : i32
  }
  func.func @transform_2(%arg0: i32, %arg1: i32) -> (i32, i32, i32, i32) {
    %c0_i32 = arith.constant 0 : i32
    %c0_i32_0 = arith.constant 0 : i32
    %c0_i32_1 = arith.constant 0 : i32
    return %arg0, %c0_i32, %arg1, %c0_i32_0 : i32, i32, i32, i32
  }
  func.func @transform_3(%arg0: i32, %arg1: i32) -> (i32, i32, i32, i32) {
    %c0_i32 = arith.constant 0 : i32
    %c0_i32_0 = arith.constant 0 : i32
    %c0_i32_1 = arith.constant 0 : i32
    return %arg0, %c0_i32, %arg1, %c0_i32_0 : i32, i32, i32, i32
  }
}

</mosaic_0001>

<llo_original>
// kernel: tpu_custom_call.1
$region0: #{tpu_custom_call.1}
  #allocation0 [shape = 'u32[]', space=smem, size = 0x4, offset = 0x4, fixed_abs, tag = 'smem constant byte address 0x4 - core index']
  #allocation1 [shape = 'u32[144,128]{1,0:T(1,128)}', space=vmem, size = 0x12000, scoped, tag = 'internal scratch']
  %s0 = inlined_call_operand.hbm [shape: f32[3,4], index: 0, kind: input, shape index: {}]
  %s1 = inlined_call_operand.vmem [shape: f32[3], index: 1, kind: input, shape index: {}]
  %s2 = inlined_call_operand.hbm [shape: f32[2,4,2,128], index: 2, kind: input, shape index: {}]
  %s3 = inlined_call_operand.hbm [shape: f32[2,3,2,128], index: 3, kind: output, shape index: {}]
  %s4 = sld [smem:[#allocation0]]
  $region57: #{tpu_custom_call.1} parent=0
    _
  %s6 = ssub.s32 1, %s4
  %s7 = scalar_select 0, %s6, %s4
  $region1: #{tpu_custom_call.1} parent=0
    #allocation2 [shape = 'u8[2048]{0}', space=smem, size = 0x800, scoped, tag = 'input window, operand 0, single buffered']
    #allocation3 [shape = 's32[2]{0}', space=sflag, size = 0x8, scoped, tag = 'scoped memory for tpu_custom_call.1']
    #allocation4 [shape = 's32[2]{0}', space=sflag, size = 0x8, scoped, tag = 'scoped memory for tpu_custom_call.1']
    #allocation5 [shape = 's32[2]{0}', space=sflag, size = 0x8, scoped, tag = 'scoped memory for tpu_custom_call.1']
    #allocation6 [shape = 's32[2]{0}', space=sflag, size = 0x8, scoped, tag = 'scoped memory for tpu_custom_call.1']
    #allocation7 [shape = 'u8[512]{0}', space=smem, size = 0x200, scoped, tag = 'input window, operand 1, single buffered']
    #allocation8 [shape = 'u8[8192]{0}', space=vmem, size = 0x2000, scoped, tag = 'input window, operand 2']
    #allocation9 [shape = 'u8[6144]{0}', space=vmem, size = 0x1800, scoped, tag = 'output window, operand 0']
    %8 = vsyncpa [#allocation5], 0
    %9 = vsyncpa [#allocation6], 0
    %10 = vsyncpa [#allocation3], 0
    %s11 = scalar_lea.sflag [#allocation3], 1
    %12 = vsyncpa %s11, 0
    %13 = vsyncpa [#allocation4], 0
    %s14 = scalar_lea.sflag [#allocation4], 1
    %15 = vsyncpa %s14, 0
    loop: start=0, step=1, limit=4
    $region2: #{tpu_custom_call.1} parent=1 // loop_pre_header
      _
    $region3: #{tpu_custom_call.1} parent=1 // loop_header
      %s17 = sphi 0, %s21
      %p18 = scmp.ge.s32.totalorder %s17, 4
      %s24 = sphi 0, %s36
      %s25 = sphi 0, %s32
      %s26 = sphi 0, %s24
      %s27 = sphi 0, %s25
      %s28 = sphi 0, %s26
      %s29 = sphi 0, %s27
      %s37 = sphi 0, %s37
      %s39 = sphi 0, %s37
      %s40 = sphi 0, %s39
      %s54 = sphi 0, %s40
      %s58 = sphi 0, %s58
      %s60 = sphi 0, %s58
      %s61 = sphi 0, %s60
      %s75 = sphi 0, %s61
      %s83 = sphi 0, %s85
      %s86 = sphi 0, %s83
      %s87 = sphi 0, %s86
      %s103 = sphi 0, %s87
      %s111 = sphi 0, %s113
      %s114 = sphi 0, %s111
      %s115 = sphi 0, %s114
      %s131 = sphi 0, %s115
    $region4: #{tpu_custom_call.1} parent=1 // loop_header_branch
      %20 = sbr.rel (%p18) target = $region8
    $region5: #{tpu_custom_call.1} parent=1 // loop_body
      %s22 = ssub.s32 %s17, 1
      %s23 = ssub.s32 %s17, 2
      %s30 = sadd.s32 1, %s25
      %p31 = scmp.ge.s32.totalorder %s30, 1
      %s32 = scalar_select %p31, 0, %s30
      %s33 = sadd.s32 1, %s24
      %s34 = scalar_select %p31, %s33, %s24
      %p35 = scmp.ge.s32.totalorder %s34, 2
      %s36 = scalar_select %p35, 0, %s34
      %s38 = sadd.s32 %s37, 1
      %p41 = scmp.eq.s32.totalorder %s17, 1
      %p42 = scmp.ne.s32.totalorder %s37, %s39
      %p43 = scmp.eq.s32.totalorder %s17, 0
      %p44 = por %p42, %p43
      %p45 = scmp.ne.s32.totalorder %s37, %s39
      %p46 = scmp.eq.s32.totalorder %s22, 1
      %p47 = por %p45, %p46
      %p48 = scmp.ne.s32.totalorder %s39, %s40
      %p49 = scmp.eq.s32.totalorder %s22, 0
      %p50 = por %p48, %p49
      %p51 = scmp.ne.s32.totalorder %s39, %s40
      %p52 = scmp.eq.s32.totalorder %s23, 1
      %p53 = por %p51, %p52
      %p55 = scmp.ne.s32.totalorder %s40, %s54
      %p56 = scmp.eq.s32.totalorder %s23, 0
      %p57 = por %p55, %p56
      %s59 = sadd.s32 %s58, 1
      %p62 = scmp.eq.s32.totalorder %s17, 1
      %p63 = scmp.ne.s32.totalorder %s58, %s60
      %p64 = scmp.eq.s32.totalorder %s17, 0
      %p65 = por %p63, %p64
      %p66 = scmp.ne.s32.totalorder %s58, %s60
      %p67 = scmp.eq.s32.totalorder %s22, 1
      %p68 = por %p66, %p67
      %p69 = scmp.ne.s32.totalorder %s60, %s61
      %p70 = scmp.eq.s32.totalorder %s22, 0
      %p71 = por %p69, %p70
      %p72 = scmp.ne.s32.totalorder %s60, %s61
      %p73 = scmp.eq.s32.totalorder %s23, 1
      %p74 = por %p72, %p73
      %p76 = scmp.ne.s32.totalorder %s61, %s75
      %p77 = scmp.eq.s32.totalorder %s23, 0
      %p78 = por %p76, %p77
      %s79 = ssub.s32 %s24, %s36
      %s80 = ssub.s32 %s25, %s32
      %s81 = sor.u32 %s79, %s80
      %p82 = scmp.eq.s32.totalorder %s81, 0
      %s84 = sadd.s32 %s83, 1
      %s85 = scalar_select %p82, %s83, %s84
      %p88 = pneg %p82
      %p89 = scmp.eq.s32.totalorder %s17, 1
      %p90 = por %p88, %p89
      %p91 = scmp.ne.s32.totalorder %s83, %s86
      %p92 = scmp.eq.s32.totalorder %s17, 0
      %p93 = por %p91, %p92
      %p94 = scmp.ne.s32.totalorder %s83, %s86
      %p95 = scmp.eq.s32.totalorder %s22, 1
      %p96 = por %p94, %p95
      %p97 = scmp.ne.s32.totalorder %s86, %s87
      %p98 = scmp.eq.s32.totalorder %s22, 0
      %p99 = por %p97, %p98
      %p100 = scmp.ne.s32.totalorder %s86, %s87
      %p101 = scmp.eq.s32.totalorder %s23, 1
      %p102 = por %p100, %p101
      %p104 = scmp.ne.s32.totalorder %s87, %s103
      %p105 = scmp.eq.s32.totalorder %s23, 0
      %p106 = por %p104, %p105
      %s107 = ssub.s32 %s24, %s36
      %s108 = ssub.s32 %s25, %s32
      %s109 = sor.u32 %s107, %s108
      %p110 = scmp.eq.s32.totalorder %s109, 0
      %s112 = sadd.s32 %s111, 1
      %s113 = scalar_select %p110, %s111, %s112
      %p116 = pneg %p110
      %p117 = scmp.eq.s32.totalorder %s17, 1
      %p118 = por %p116, %p117
      %p119 = scmp.ne.s32.totalorder %s111, %s114
      %p120 = scmp.eq.s32.totalorder %s17, 0
      %p121 = por %p119, %p120
      %p122 = scmp.ne.s32.totalorder %s111, %s114
      %p123 = scmp.eq.s32.totalorder %s22, 1
      %p124 = por %p122, %p123
      %p125 = scmp.ne.s32.totalorder %s114, %s115
      %p126 = scmp.eq.s32.totalorder %s22, 0
      %p127 = por %p125, %p126
      %p128 = scmp.ne.s32.totalorder %s114, %s115
      %p129 = scmp.eq.s32.totalorder %s23, 1
      %p130 = por %p128, %p129
      %p132 = scmp.ne.s32.totalorder %s115, %s131
      %p133 = scmp.eq.s32.totalorder %s23, 0
      %p134 = por %p132, %p133
      %p135 = scmp.le.s32.totalorder 1, %s17
      %p136 = scmp.lt.s32.totalorder %s17, 3
      %p137 = pnand %p135, %p136
      %p138 = pneg %p137
      // Predicated region
      $region9: #{tpu_custom_call.1} parent=5 // pred_check
        _
      $region10: #{tpu_custom_call.1} parent=5 // pred_check_branch
        %140 = sbr.rel (%p137) target = $region12
      $region11: #{tpu_custom_call.1} parent=5 // pred_region
        %s141 = ssub.s32 %s17, 1
        // Predicated region
        $region13: #{tpu_custom_call.1} parent=11 // pred_check
          %p142 = pneg %p50
        $region14: #{tpu_custom_call.1} parent=11 // pred_check_branch
          %144 = sbr.rel (%p142) target = $region16
        $region15: #{tpu_custom_call.1} parent=11 // pred_region
          %s146 = ssub.s32 64, 64
          %147 = vsyncadd [#allocation5], %s146
          %150 = dma.hbm_to_smem %s0, 64, [#allocation2], [#allocation5]
        $region16: #{tpu_custom_call.1} parent=11 // pred_fallthru
          _
        // Predicated region
        $region17: #{tpu_custom_call.1} parent=11 // pred_check
          %p151 = pneg %p71
        $region18: #{tpu_custom_call.1} parent=11 // pred_check_branch
          %153 = sbr.rel (%p151) target = $region20
        $region19: #{tpu_custom_call.1} parent=11 // pred_region
          %s155 = ssub.s32 16, 16
          %156 = vsyncadd [#allocation6], %s155
          %s158 = sshll.u32 %s1, 4
          %s159 = int_to_ptr.vmem [resolvable:$true] %s158
          %161 = dma.vmem_to_smem %s159, 16, [#allocation7], [#allocation6]
        $region20: #{tpu_custom_call.1} parent=11 // pred_fallthru
          _
      $region12: #{tpu_custom_call.1} parent=5 // pred_fallthru
        _
      %p162 = scmp.lt.s32.totalorder %s17, 2
      // Predicated region
      $region21: #{tpu_custom_call.1} parent=5 // pred_check
        %p163 = pneg %p162
      $region22: #{tpu_custom_call.1} parent=5 // pred_check_branch
        %165 = sbr.rel (%p163) target = $region24
      $region23: #{tpu_custom_call.1} parent=5 // pred_region
        // Predicated region
        $region25: #{tpu_custom_call.1} parent=23 // pred_check
          %p166 = pneg %p93
        $region26: #{tpu_custom_call.1} parent=23 // pred_check_branch
          %168 = sbr.rel (%p166) target = $region28
        $region27: #{tpu_custom_call.1} parent=23 // pred_region
          %s169 = sand.u32 %s83, 1
          %s170 = scalar_lea.sflag [#allocation3], %s169
          %s171 = sand.u32 %s83, 1
          %s172 = smul.addr %s171, 8
          %s173 = scalar_lea.vmem [#allocation8], %s172
          %s175 = ssub.s32 128, 128
          %176 = vsyncadd %s170, %s175
          %s177 = smul.addr %s24, 4
          %s178 = sadd.s32 %s25, %s177
          %s179 = smul.addr %s178, 32
          %s180 = scalar_lea.hbm %s2, %s179
          %s181 = sshll.u32 %s173, 4
          %s182 = int_to_ptr.vmem [resolvable:$true] %s181
          %187 = dma.hbm_to_vmem [thread:$0]  %s180, 128, %s182, %s170, 32, 32, 2
        $region28: #{tpu_custom_call.1} parent=23 // pred_fallthru
          _
      $region24: #{tpu_custom_call.1} parent=5 // pred_fallthru
        _
      %p188 = scmp.le.s32.totalorder 1, %s17
      %p189 = scmp.lt.s32.totalorder %s17, 3
      %p190 = pnand %p188, %p189
      %p191 = pneg %p190
      // Predicated region
      $region29: #{tpu_custom_call.1} parent=5 // pred_check
        _
      $region30: #{tpu_custom_call.1} parent=5 // pred_check_branch
        %193 = sbr.rel (%p190) target = $region32
      $region31: #{tpu_custom_call.1} parent=5 // pred_region
        %s194 = ssub.s32 %s17, 1
        // Predicated region
        $region33: #{tpu_custom_call.1} parent=31 // pred_check
          %p195 = pneg %p50
        $region34: #{tpu_custom_call.1} parent=31 // pred_check_branch
          %197 = sbr.rel (%p195) target = $region36
        $region35: #{tpu_custom_call.1} parent=31 // pred_region
          %198 = dma.done [#allocation5], 64
        $region36: #{tpu_custom_call.1} parent=31 // pred_fallthru
          _
        // Predicated region
        $region37: #{tpu_custom_call.1} parent=31 // pred_check
          %p199 = pneg %p71
        $region38: #{tpu_custom_call.1} parent=31 // pred_check_branch
          %201 = sbr.rel (%p199) target = $region40
        $region39: #{tpu_custom_call.1} parent=31 // pred_region
          %202 = dma.done [#allocation6], 16
        $region40: #{tpu_custom_call.1} parent=31 // pred_fallthru
          _
        %s203 = sand.u32 %s86, 1
        %s204 = scalar_lea.sflag [#allocation3], %s203
        %s205 = sand.u32 %s86, 1
        %s206 = smul.addr %s205, 8
        %s207 = scalar_lea.vmem [#allocation8], %s206
        // Predicated region
        $region41: #{tpu_custom_call.1} parent=31 // pred_check
          %p208 = pneg %p99
        $region42: #{tpu_custom_call.1} parent=31 // pred_check_branch
          %210 = sbr.rel (%p208) target = $region44
        $region43: #{tpu_custom_call.1} parent=31 // pred_region
          %211 = dma.done %s204, 128
        $region44: #{tpu_custom_call.1} parent=31 // pred_fallthru
          _
        %212 = sfence
        %p213 = pneg %p50
        %p214 = pneg %p47
        %p215 = pneg %p71
        %p216 = pneg %p68
        %s217 = sand.u32 %s86, 1
        %s218 = scalar_lea.sflag [#allocation3], %s217
        %s219 = sand.u32 %s86, 1
        %s220 = smul.addr %s219, 8
        %s221 = scalar_lea.vmem [#allocation8], %s220
        %p222 = pneg %p99
        %p223 = pneg %p96
        %p224 = pneg %p127
        %p225 = pneg %p124
        %s226 = sand.u32 %s114, 1
        %s227 = scalar_lea.sflag [#allocation4], %s226
        %s228 = sand.u32 %s114, 1
        %s229 = smul.addr %s228, 6
        %s230 = scalar_lea.vmem [#allocation9], %s229
        %v231 = vld [vmem:[%s207] sm:$0x3]
        %s232 = sld [smem:[#allocation2]]
        %v233 = vstv %s232
        %v234 = vmul.f32 %v231, %v233
        %s235 = sld [smem:[#allocation7]]
        %v236 = vstv %s235
        %v237 = vadd.f32 %v234, %v236
        %s238 = scalar_lea.vmem %s207, 2 [#allocation8]
        %v239 = vld [vmem:[%s238] sm:$0x3]
        %s240 = sld [smem:[#allocation2 + $0x1]]
        %v241 = vstv %s240
        %v242 = vmul.f32 %v239, %v241
        %v243 = vadd.f32 %v237, %v242
        %s244 = scalar_lea.vmem %s207, 4 [#allocation8]
        %v245 = vld [vmem:[%s244] sm:$0x3]
        %s246 = sld [smem:[#allocation2 + $0x2]]
        %v247 = vstv %s246
        %v248 = vmul.f32 %v245, %v247
        %v249 = vadd.f32 %v243, %v248
        %s250 = scalar_lea.vmem %s207, 6 [#allocation8]
        %v251 = vld [vmem:[%s250] sm:$0x3]
        %s252 = sld [smem:[#allocation2 + $0x3]]
        %v253 = vstv %s252
        %v254 = vmul.f32 %v251, %v253
        %v255 = vadd.f32 %v249, %v254
        %256 = vst [vmem:[%s230] sm:$0x3] %v255
        %v257 = vld [vmem:[%s207] sm:$0x3]
        %s258 = sld [smem:[#allocation2 + $0x80]]
        %v259 = vstv %s258
        %v260 = vmul.f32 %v257, %v259
        %s261 = sld [smem:[#allocation7 + $0x1]]
        %v262 = vstv %s261
        %v263 = vadd.f32 %v260, %v262
        %v264 = vld [vmem:[%s238] sm:$0x3]
        %s265 = sld [smem:[#allocation2 + $0x81]]
        %v266 = vstv %s265
        %v267 = vmul.f32 %v264, %v266
        %v268 = vadd.f32 %v263, %v267
        %v269 = vld [vmem:[%s244] sm:$0x3]
        %s270 = sld [smem:[#allocation2 + $0x82]]
        %v271 = vstv %s270
        %v272 = vmul.f32 %v269, %v271
        %v273 = vadd.f32 %v268, %v272
        %v274 = vld [vmem:[%s250] sm:$0x3]
        %s275 = sld [smem:[#allocation2 + $0x83]]
        %v276 = vstv %s275
        %v277 = vmul.f32 %v274, %v276
        %v278 = vadd.f32 %v273, %v277
        %s279 = scalar_lea.vmem %s230, 2 [#allocation9]
        %280 = vst [vmem:[%s279] sm:$0x3] %v278
        %v281 = vld [vmem:[%s207] sm:$0x3]
        %s282 = sld [smem:[#allocation2 + $0x100]]
        %v283 = vstv %s282
        %v284 = vmul.f32 %v281, %v283
        %s285 = sld [smem:[#allocation7 + $0x2]]
        %v286 = vstv %s285
        %v287 = vadd.f32 %v284, %v286
        %v288 = vld [vmem:[%s238] sm:$0x3]
        %s289 = sld [smem:[#allocation2 + $0x101]]
        %v290 = vstv %s289
        %v291 = vmul.f32 %v288, %v290
        %v292 = vadd.f32 %v287, %v291
        %v293 = vld [vmem:[%s244] sm:$0x3]
        %s294 = sld [smem:[#allocation2 + $0x102]]
        %v295 = vstv %s294
        %v296 = vmul.f32 %v293, %v295
        %v297 = vadd.f32 %v292, %v296
        %v298 = vld [vmem:[%s250] sm:$0x3]
        %s299 = sld [smem:[#allocation2 + $0x103]]
        %v300 = vstv %s299
        %v301 = vmul.f32 %v298, %v300
        %v302 = vadd.f32 %v297, %v301
        %s303 = scalar_lea.vmem %s230, 4 [#allocation9]
        %304 = vst [vmem:[%s303] sm:$0x3] %v302
        %s305 = sand.u32 %s114, 1
        %s306 = scalar_lea.sflag [#allocation4], %s305
        %s307 = sand.u32 %s114, 1
        %s308 = smul.addr %s307, 6
        %s309 = scalar_lea.vmem [#allocation9], %s308
        // Predicated region
        $region45: #{tpu_custom_call.1} parent=31 // pred_check
          %p310 = pneg %p124
        $region46: #{tpu_custom_call.1} parent=31 // pred_check_branch
          %312 = sbr.rel (%p310) target = $region48
        $region47: #{tpu_custom_call.1} parent=31 // pred_region
          %s314 = ssub.s32 96, 96
          %315 = vsyncadd %s306, %s314
          %s316 = smul.addr %s26, 3
          %s317 = sadd.s32 %s27, %s316
          %s318 = smul.addr %s317, 32
          %s319 = scalar_lea.hbm %s3, %s318
          %s320 = sshll.u32 %s309, 4
          %s321 = int_to_ptr.vmem [resolvable:$true] %s320
          %326 = dma.vmem_to_hbm [thread:$0]  %s321, 96, %s319, %s306, 32, 32, 2
        $region48: #{tpu_custom_call.1} parent=31 // pred_fallthru
          _
      $region32: #{tpu_custom_call.1} parent=5 // pred_fallthru
        _
      %p327 = scmp.le.s32.totalorder 2, %s17
      // Predicated region
      $region49: #{tpu_custom_call.1} parent=5 // pred_check
        %p328 = pneg %p327
      $region50: #{tpu_custom_call.1} parent=5 // pred_check_branch
        %330 = sbr.rel (%p328) target = $region52
      $region51: #{tpu_custom_call.1} parent=5 // pred_region
        %s331 = ssub.s32 %s17, 2
        // Predicated region
        $region53: #{tpu_custom_call.1} parent=51 // pred_check
          %p332 = pneg %p130
        $region54: #{tpu_custom_call.1} parent=51 // pred_check_branch
          %334 = sbr.rel (%p332) target = $region56
        $region55: #{tpu_custom_call.1} parent=51 // pred_region
          %s335 = sand.u32 %s115, 1
          %s336 = scalar_lea.sflag [#allocation4], %s335
          %s337 = sand.u32 %s115, 1
          %s338 = smul.addr %s337, 6
          %s339 = scalar_lea.vmem [#allocation9], %s338
          %340 = dma.done %s336, 96
        $region56: #{tpu_custom_call.1} parent=51 // pred_fallthru
          _
      $region52: #{tpu_custom_call.1} parent=5 // pred_fallthru
        _
    $region6: #{tpu_custom_call.1} parent=1 // loop_footer
      %s21 = sadd.s32 1, %s17
    $region7: #{tpu_custom_call.1} parent=1 // loop_footer_branch
      %16 = sbr.rel target = $region3
    $region8: #{tpu_custom_call.1} parent=1 // loop_exit
      _
    %341 = vsyncpa [#allocation3], 1
    %s342 = scalar_lea.sflag [#allocation3], 1
    %343 = vsyncpa %s342, 1
    %344 = vsyncpa [#allocation4], 1
    %s345 = scalar_lea.sflag [#allocation4], 1
    %346 = vsyncpa %s345, 1
    %347 = vsyncpa [#allocation5], 1
    %s348 = scalar_lea.sflag [#allocation5], 1
    %349 = vsyncpa %s348, 1
    %350 = vsyncpa [#allocation6], 1
    %s351 = scalar_lea.sflag [#allocation6], 1
    %352 = vsyncpa %s351, 1

</llo_original>
